<compile_context>
chip_gen: v7x
topology: tpu7x:2x2x1
jax: 0.10.0
libtpu: 0.0.40
codegen_flags: <defaults>
</compile_context>

<pallas_src>
import math

import jax
import jax.numpy as jnp
from jax import lax
from jax.experimental import pallas as pl
from jax.experimental.pallas import tpu as pltpu


_TINY_ROW_BYTES = 512        # rows smaller than this go through jnp.take (pure DMA fixed cost)
_MAX_INFLIGHT_ROWS = 8       # sliding-window depth (v7x needs ~2x v6e bytes in flight)


def _make_reorder_kernel(num_tensors: int, n_rows: int, depth: int):
    """Kernel gathering `num_tensors` HBM arrays along axis 0 with a sliding
    window of `depth` rows of outstanding HBM->HBM DMAs."""

    def kernel(order_ref, *refs):
        states = refs[:num_tensors]
        outs = refs[num_tensors:2 * num_tensors]
        sem = refs[2 * num_tensors]          # DMA sems, shape (depth, num_tensors)

        def issue(dst_row, src_row, slot):
            # One contiguous row DMA per tensor; all left in flight.
            for k in range(num_tensors):
                pltpu.make_async_copy(
                    states[k].at[src_row], outs[k].at[dst_row], sem.at[slot, k]
                ).start()

        # Prime the window: rows 0 .. depth-1 (depth <= n_rows by construction).
        for d in range(depth):
            issue(d, order_ref[d], d)

        def body(i, carry):
            slot = i % depth
            nxt = i + depth
            # Read the next row's source index from SMEM BEFORE any DMA wait
            # (.wait() breaks SMEM store->load forwarding).
            nxt_src = order_ref[jnp.minimum(nxt, n_rows - 1)]

            # Wait for row i's copies.  Every row of tensor k has the same
            # transfer size, so an index-0 descriptor waits correctly on the
            # (slot, k) semaphore.
            for k in range(num_tensors):
                pltpu.make_async_copy(
                    states[k].at[0], outs[k].at[0], sem.at[slot, k]
                ).wait()

            # Refill the window with row i+depth (re-using row i's sem slot).
            @pl.when(nxt < n_rows)
            def _():
                issue(nxt, nxt_src, slot)

            return carry

        lax.fori_loop(0, n_rows, body, 0)

    return kernel


def _dma_reorder(flat_states, new_order):
    """One fused HBM->HBM DMA gather over a list of (B, inner) arrays."""
    num = len(flat_states)
    n_rows = int(new_order.shape[0])
    depth = max(1, min(_MAX_INFLIGHT_ROWS, n_rows))

    out_shapes = tuple(
        jax.ShapeDtypeStruct((n_rows, t.shape[1]), t.dtype) for t in flat_states
    )
    total_bytes = sum(
        n_rows * t.shape[1] * jnp.dtype(t.dtype).itemsize for t in flat_states
    )

    grid_spec = pltpu.PrefetchScalarGridSpec(
        num_scalar_prefetch=1,
        grid=(1,),  # collapsed grid: rows are driven by the in-kernel loop
        in_specs=[pl.BlockSpec(memory_space=pl.ANY) for _ in range(num)],
        out_specs=tuple(pl.BlockSpec(memory_space=pl.ANY) for _ in range(num)),
        scratch_shapes=[pltpu.SemaphoreType.DMA((depth, num))],
    )

    outs = pl.pallas_call(
        _make_reorder_kernel(num, n_rows, depth),
        out_shape=out_shapes,
        grid_spec=grid_spec,
        compiler_params=pltpu.CompilerParams(
            dimension_semantics=("arbitrary",),
        ),
        cost_estimate=pl.CostEstimate(
            flops=0, transcendentals=0, bytes_accessed=2 * total_bytes),
    )(new_order, *flat_states)

    return jax.tree_util.tree_leaves(outs)


def reorder_incremental_state(incremental_state, new_order):
    """Pallas equivalent of `state.index_select(0, new_order)` applied to every
    cached tensor of a (possibly nested) incremental_state dict."""
    if not incremental_state:
        return incremental_state

    new_order = jnp.asarray(new_order, dtype=jnp.int32)
    n_rows = int(new_order.shape[0])

    leaves, treedef = jax.tree_util.tree_flatten(incremental_state)  # None leaves drop out
    out_leaves = list(leaves)

    dma_idx, dma_flat = [], []
    for i, leaf in enumerate(leaves):
        if not hasattr(leaf, "ndim") or leaf.ndim < 1 or leaf.shape[0] == 0:
            # TODO(synk): fairseq caches can hold leaves whose leading dim is not the
            # beam axis (e.g. padding masks); callers should exclude those entries.
            continue
        row_bytes = math.prod(leaf.shape[1:]) * jnp.dtype(leaf.dtype).itemsize
        if n_rows == 0:
            out_leaves[i] = leaf[:0]
        elif row_bytes < _TINY_ROW_BYTES:
            # Sub-KiB rows are almost pure DMA fixed cost: let XLA's fused gather do them.
            out_leaves[i] = jnp.take(leaf, new_order, axis=0)
        else:
            dma_idx.append(i)
            # Flatten to (B, inner): one contiguous DMA per row, any inner shape/dtype.
            dma_flat.append(leaf.reshape(leaf.shape[0], -1))

    if dma_flat:
        # TODO(synk): same-shaped tensors (prev_key/prev_value across layers/heads)
        # should be stacked (B, K*inner) at cache-allocation time so each beam needs
        # one DMA instead of K; that is a caller-side cache-layout change.
        # TODO(synk): an in-place aliased variant (input_output_aliases + staged VMEM
        # chunks) would avoid duplicating the cache in HBM each decode step.
        gathered = _dma_reorder(dma_flat, new_order)
        for i, g in zip(dma_idx, gathered):
            out_leaves[i] = g.reshape((n_rows,) + leaves[i].shape[1:])

    return jax.tree_util.tree_unflatten(treedef, out_leaves)


class Seq2SeqDecoder:
    """JAX/Pallas port of the abstract fairseq-style Seq2SeqDecoder base class."""

    def __init__(self, dictionary):
        self.dictionary = dictionary  # the reference __init__ registers no parameters

    def forward(self, src_inputs, tgt_inputs, encoder_out):
        # TODO(synk): abstract in the reference module (raises NotImplementedError);
        # concrete subclasses define the actual decoder compute.
        raise NotImplementedError

    def __call__(self, *args, **kwargs):
        return self.forward(*args, **kwargs)

    def reorder_incremental_state(self, incremental_state, new_order):
        # The reference walks submodules via nn.Module.apply; here the cached
        # tensors of the provided state dict are reordered directly with one
        # fused Pallas HBM->HBM DMA gather.
        return reorder_incremental_state(incremental_state, new_order)


if __name__ == "__main__":
    key = jax.random.PRNGKey(0)
    k1, k2, k3 = jax.random.split(key, 3)

    # Small beam-search-like shapes: 4 beams, seq=8, hidden=32.  Nested dict +
    # a None entry + a tiny (B, H) state exercise every wrapper path.
    B, T, H = 4, 8, 32
    incremental_state = {
        "attn": {
            "prev_key": jax.random.normal(k1, (B, T, H), dtype=jnp.float32),
            "prev_value": jax.random.normal(k2, (B, T, H), dtype=jnp.float32),
        },
        "prev_state": jax.random.normal(k3, (B, H), dtype=jnp.float32),  # tiny row -> jnp.take
        "padding_mask": None,                                            # passes through
    }
    # Typical beam reorder: some beams duplicated, some dropped.
    new_order = jnp.array([2, 2, 0, 3], dtype=jnp.int32)

    decoder = Seq2SeqDecoder(dictionary=None)
    reordered = decoder.reorder_incremental_state(incremental_state, new_order)
    reordered = jax.block_until_ready(reordered)

    # A gather/copy must be bit-exact against the plain-JAX reference.
    ok = (
        bool(jnp.array_equal(reordered["attn"]["prev_key"],
                             incremental_state["attn"]["prev_key"][new_order]))
        and bool(jnp.array_equal(reordered["attn"]["prev_value"],
                                 incremental_state["attn"]["prev_value"][new_order]))
        and bool(jnp.array_equal(reordered["prev_state"],
                                 incremental_state["prev_state"][new_order]))
        and reordered["padding_mask"] is None
    )
    print("KERNEL_OK" if ok else "KERNEL_MISMATCH")
</pallas_src>

<mosaic_0001>
module attributes {stable_mosaic.version = 11 : i64} {
  func.func @kernel(%arg0: i32, %arg1: memref<4xi32, #tpu.memory_space<smem>>, %arg2: memref<4x256xf32, #tpu.memory_space<any>>, %arg3: memref<4x256xf32, #tpu.memory_space<any>>, %arg4: memref<4x256xf32, #tpu.memory_space<any>>, %arg5: memref<4x256xf32, #tpu.memory_space<any>>, %arg6: memref<4x2x!tpu.dma_semaphore, #tpu.memory_space<semaphore_mem>>) attributes {dimension_semantics = [#tpu.dimension_semantics<arbitrary>], iteration_bounds = array<i64: 1>, scalar_prefetch = 1 : i64, scratch_operands = 1 : i64, tpu.core_type = #tpu.core_type<tc>, window_params = [{}, {}, {}, {}]} {
    %c0 = arith.constant 0 : index
    %0 = memref.load %arg1[%c0] : memref<4xi32, #tpu.memory_space<smem>>
    %c0_i32 = arith.constant 0 : i32
    %c0_i32_0 = arith.constant 0 : i32
    %c0_i32_1 = arith.constant 0 : i32
    %c0_i32_2 = arith.constant 0 : i32
    %1 = tpu.memref_slice %arg2[%0, %c0_i32_2] : memref<4x256xf32, #tpu.memory_space<any>> -> memref<1x256xf32, #tpu.memory_space<any>>
    %2 = tpu.memref_squeeze %1 : memref<1x256xf32, #tpu.memory_space<any>> -> memref<256xf32, #tpu.memory_space<any>>
    %c0_i32_3 = arith.constant 0 : i32
    %3 = tpu.memref_slice %arg4[%c0_i32, %c0_i32_3] : memref<4x256xf32, #tpu.memory_space<any>> -> memref<1x256xf32, #tpu.memory_space<any>>
    %4 = tpu.memref_squeeze %3 : memref<1x256xf32, #tpu.memory_space<any>> -> memref<256xf32, #tpu.memory_space<any>>
    %5 = tpu.memref_slice %arg6[%c0_i32_0, %c0_i32_1] : memref<4x2x!tpu.dma_semaphore, #tpu.memory_space<semaphore_mem>> -> memref<1x1x!tpu.dma_semaphore, #tpu.memory_space<semaphore_mem>>
    %6 = tpu.memref_squeeze %5 : memref<1x1x!tpu.dma_semaphore, #tpu.memory_space<semaphore_mem>> -> memref<!tpu.dma_semaphore, #tpu.memory_space<semaphore_mem>>
    tpu.enqueue_dma source(%2 : memref<256xf32, #tpu.memory_space<any>>) target(%4 : memref<256xf32, #tpu.memory_space<any>>) target_semaphore(%6 : memref<!tpu.dma_semaphore, #tpu.memory_space<semaphore_mem>>)
    %c0_i32_4 = arith.constant 0 : i32
    %c0_i32_5 = arith.constant 0 : i32
    %c1_i32 = arith.constant 1 : i32
    %c0_i32_6 = arith.constant 0 : i32
    %7 = tpu.memref_slice %arg3[%0, %c0_i32_6] : memref<4x256xf32, #tpu.memory_space<any>> -> memref<1x256xf32, #tpu.memory_space<any>>
    %8 = tpu.memref_squeeze %7 : memref<1x256xf32, #tpu.memory_space<any>> -> memref<256xf32, #tpu.memory_space<any>>
    %c0_i32_7 = arith.constant 0 : i32
    %9 = tpu.memref_slice %arg5[%c0_i32_4, %c0_i32_7] : memref<4x256xf32, #tpu.memory_space<any>> -> memref<1x256xf32, #tpu.memory_space<any>>
    %10 = tpu.memref_squeeze %9 : memref<1x256xf32, #tpu.memory_space<any>> -> memref<256xf32, #tpu.memory_space<any>>
    %11 = tpu.memref_slice %arg6[%c0_i32_5, %c1_i32] : memref<4x2x!tpu.dma_semaphore, #tpu.memory_space<semaphore_mem>> -> memref<1x1x!tpu.dma_semaphore, #tpu.memory_space<semaphore_mem>>
    %12 = tpu.memref_squeeze %11 : memref<1x1x!tpu.dma_semaphore, #tpu.memory_space<semaphore_mem>> -> memref<!tpu.dma_semaphore, #tpu.memory_space<semaphore_mem>>
    tpu.enqueue_dma source(%8 : memref<256xf32, #tpu.memory_space<any>>) target(%10 : memref<256xf32, #tpu.memory_space<any>>) target_semaphore(%12 : memref<!tpu.dma_semaphore, #tpu.memory_space<semaphore_mem>>)
    %c1 = arith.constant 1 : index
    %13 = memref.load %arg1[%c1] : memref<4xi32, #tpu.memory_space<smem>>
    %c1_i32_8 = arith.constant 1 : i32
    %c1_i32_9 = arith.constant 1 : i32
    %c0_i32_10 = arith.constant 0 : i32
    %c0_i32_11 = arith.constant 0 : i32
    %14 = tpu.memref_slice %arg2[%13, %c0_i32_11] : memref<4x256xf32, #tpu.memory_space<any>> -> memref<1x256xf32, #tpu.memory_space<any>>
    %15 = tpu.memref_squeeze %14 : memref<1x256xf32, #tpu.memory_space<any>> -> memref<256xf32, #tpu.memory_space<any>>
    %c0_i32_12 = arith.constant 0 : i32
    %16 = tpu.memref_slice %arg4[%c1_i32_8, %c0_i32_12] : memref<4x256xf32, #tpu.memory_space<any>> -> memref<1x256xf32, #tpu.memory_space<any>>
    %17 = tpu.memref_squeeze %16 : memref<1x256xf32, #tpu.memory_space<any>> -> memref<256xf32, #tpu.memory_space<any>>
    %18 = tpu.memref_slice %arg6[%c1_i32_9, %c0_i32_10] : memref<4x2x!tpu.dma_semaphore, #tpu.memory_space<semaphore_mem>> -> memref<1x1x!tpu.dma_semaphore, #tpu.memory_space<semaphore_mem>>
    %19 = tpu.memref_squeeze %18 : memref<1x1x!tpu.dma_semaphore, #tpu.memory_space<semaphore_mem>> -> memref<!tpu.dma_semaphore, #tpu.memory_space<semaphore_mem>>
    tpu.enqueue_dma source(%15 : memref<256xf32, #tpu.memory_space<any>>) target(%17 : memref<256xf32, #tpu.memory_space<any>>) target_semaphore(%19 : memref<!tpu.dma_semaphore, #tpu.memory_space<semaphore_mem>>)
    %c1_i32_13 = arith.constant 1 : i32
    %c1_i32_14 = arith.constant 1 : i32
    %c1_i32_15 = arith.constant 1 : i32
    %c0_i32_16 = arith.constant 0 : i32
    %20 = tpu.memref_slice %arg3[%13, %c0_i32_16] : memref<4x256xf32, #tpu.memory_space<any>> -> memref<1x256xf32, #tpu.memory_space<any>>
    %21 = tpu.memref_squeeze %20 : memref<1x256xf32, #tpu.memory_space<any>> -> memref<256xf32, #tpu.memory_space<any>>
    %c0_i32_17 = arith.constant 0 : i32
    %22 = tpu.memref_slice %arg5[%c1_i32_13, %c0_i32_17] : memref<4x256xf32, #tpu.memory_space<any>> -> memref<1x256xf32, #tpu.memory_space<any>>
    %23 = tpu.memref_squeeze %22 : memref<1x256xf32, #tpu.memory_space<any>> -> memref<256xf32, #tpu.memory_space<any>>
    %24 = tpu.memref_slice %arg6[%c1_i32_14, %c1_i32_15] : memref<4x2x!tpu.dma_semaphore, #tpu.memory_space<semaphore_mem>> -> memref<1x1x!tpu.dma_semaphore, #tpu.memory_space<semaphore_mem>>
    %25 = tpu.memref_squeeze %24 : memref<1x1x!tpu.dma_semaphore, #tpu.memory_space<semaphore_mem>> -> memref<!tpu.dma_semaphore, #tpu.memory_space<semaphore_mem>>
    tpu.enqueue_dma source(%21 : memref<256xf32, #tpu.memory_space<any>>) target(%23 : memref<256xf32, #tpu.memory_space<any>>) target_semaphore(%25 : memref<!tpu.dma_semaphore, #tpu.memory_space<semaphore_mem>>)
    %c2 = arith.constant 2 : index
    %26 = memref.load %arg1[%c2] : memref<4xi32, #tpu.memory_space<smem>>
    %c2_i32 = arith.constant 2 : i32
    %c2_i32_18 = arith.constant 2 : i32
    %c0_i32_19 = arith.constant 0 : i32
    %c0_i32_20 = arith.constant 0 : i32
    %27 = tpu.memref_slice %arg2[%26, %c0_i32_20] : memref<4x256xf32, #tpu.memory_space<any>> -> memref<1x256xf32, #tpu.memory_space<any>>
    %28 = tpu.memref_squeeze %27 : memref<1x256xf32, #tpu.memory_space<any>> -> memref<256xf32, #tpu.memory_space<any>>
    %c0_i32_21 = arith.constant 0 : i32
    %29 = tpu.memref_slice %arg4[%c2_i32, %c0_i32_21] : memref<4x256xf32, #tpu.memory_space<any>> -> memref<1x256xf32, #tpu.memory_space<any>>
    %30 = tpu.memref_squeeze %29 : memref<1x256xf32, #tpu.memory_space<any>> -> memref<256xf32, #tpu.memory_space<any>>
    %31 = tpu.memref_slice %arg6[%c2_i32_18, %c0_i32_19] : memref<4x2x!tpu.dma_semaphore, #tpu.memory_space<semaphore_mem>> -> memref<1x1x!tpu.dma_semaphore, #tpu.memory_space<semaphore_mem>>
    %32 = tpu.memref_squeeze %31 : memref<1x1x!tpu.dma_semaphore, #tpu.memory_space<semaphore_mem>> -> memref<!tpu.dma_semaphore, #tpu.memory_space<semaphore_mem>>
    tpu.enqueue_dma source(%28 : memref<256xf32, #tpu.memory_space<any>>) target(%30 : memref<256xf32, #tpu.memory_space<any>>) target_semaphore(%32 : memref<!tpu.dma_semaphore, #tpu.memory_space<semaphore_mem>>)
    %c2_i32_22 = arith.constant 2 : i32
    %c2_i32_23 = arith.constant 2 : i32
    %c1_i32_24 = arith.constant 1 : i32
    %c0_i32_25 = arith.constant 0 : i32
    %33 = tpu.memref_slice %arg3[%26, %c0_i32_25] : memref<4x256xf32, #tpu.memory_space<any>> -> memref<1x256xf32, #tpu.memory_space<any>>
    %34 = tpu.memref_squeeze %33 : memref<1x256xf32, #tpu.memory_space<any>> -> memref<256xf32, #tpu.memory_space<any>>
    %c0_i32_26 = arith.constant 0 : i32
    %35 = tpu.memref_slice %arg5[%c2_i32_22, %c0_i32_26] : memref<4x256xf32, #tpu.memory_space<any>> -> memref<1x256xf32, #tpu.memory_space<any>>
    %36 = tpu.memref_squeeze %35 : memref<1x256xf32, #tpu.memory_space<any>> -> memref<256xf32, #tpu.memory_space<any>>
    %37 = tpu.memref_slice %arg6[%c2_i32_23, %c1_i32_24] : memref<4x2x!tpu.dma_semaphore, #tpu.memory_space<semaphore_mem>> -> memref<1x1x!tpu.dma_semaphore, #tpu.memory_space<semaphore_mem>>
    %38 = tpu.memref_squeeze %37 : memref<1x1x!tpu.dma_semaphore, #tpu.memory_space<semaphore_mem>> -> memref<!tpu.dma_semaphore, #tpu.memory_space<semaphore_mem>>
    tpu.enqueue_dma source(%34 : memref<256xf32, #tpu.memory_space<any>>) target(%36 : memref<256xf32, #tpu.memory_space<any>>) target_semaphore(%38 : memref<!tpu.dma_semaphore, #tpu.memory_space<semaphore_mem>>)
    %c3 = arith.constant 3 : index
    %39 = memref.load %arg1[%c3] : memref<4xi32, #tpu.memory_space<smem>>
    %c3_i32 = arith.constant 3 : i32
    %c3_i32_27 = arith.constant 3 : i32
    %c0_i32_28 = arith.constant 0 : i32
    %c0_i32_29 = arith.constant 0 : i32
    %40 = tpu.memref_slice %arg2[%39, %c0_i32_29] : memref<4x256xf32, #tpu.memory_space<any>> -> memref<1x256xf32, #tpu.memory_space<any>>
    %41 = tpu.memref_squeeze %40 : memref<1x256xf32, #tpu.memory_space<any>> -> memref<256xf32, #tpu.memory_space<any>>
    %c0_i32_30 = arith.constant 0 : i32
    %42 = tpu.memref_slice %arg4[%c3_i32, %c0_i32_30] : memref<4x256xf32, #tpu.memory_space<any>> -> memref<1x256xf32, #tpu.memory_space<any>>
    %43 = tpu.memref_squeeze %42 : memref<1x256xf32, #tpu.memory_space<any>> -> memref<256xf32, #tpu.memory_space<any>>
    %44 = tpu.memref_slice %arg6[%c3_i32_27, %c0_i32_28] : memref<4x2x!tpu.dma_semaphore, #tpu.memory_space<semaphore_mem>> -> memref<1x1x!tpu.dma_semaphore, #tpu.memory_space<semaphore_mem>>
    %45 = tpu.memref_squeeze %44 : memref<1x1x!tpu.dma_semaphore, #tpu.memory_space<semaphore_mem>> -> memref<!tpu.dma_semaphore, #tpu.memory_space<semaphore_mem>>
    tpu.enqueue_dma source(%41 : memref<256xf32, #tpu.memory_space<any>>) target(%43 : memref<256xf32, #tpu.memory_space<any>>) target_semaphore(%45 : memref<!tpu.dma_semaphore, #tpu.memory_space<semaphore_mem>>)
    %c3_i32_31 = arith.constant 3 : i32
    %c3_i32_32 = arith.constant 3 : i32
    %c1_i32_33 = arith.constant 1 : i32
    %c0_i32_34 = arith.constant 0 : i32
    %46 = tpu.memref_slice %arg3[%39, %c0_i32_34] : memref<4x256xf32, #tpu.memory_space<any>> -> memref<1x256xf32, #tpu.memory_space<any>>
    %47 = tpu.memref_squeeze %46 : memref<1x256xf32, #tpu.memory_space<any>> -> memref<256xf32, #tpu.memory_space<any>>
    %c0_i32_35 = arith.constant 0 : i32
    %48 = tpu.memref_slice %arg5[%c3_i32_31, %c0_i32_35] : memref<4x256xf32, #tpu.memory_space<any>> -> memref<1x256xf32, #tpu.memory_space<any>>
    %49 = tpu.memref_squeeze %48 : memref<1x256xf32, #tpu.memory_space<any>> -> memref<256xf32, #tpu.memory_space<any>>
    %50 = tpu.memref_slice %arg6[%c3_i32_32, %c1_i32_33] : memref<4x2x!tpu.dma_semaphore, #tpu.memory_space<semaphore_mem>> -> memref<1x1x!tpu.dma_semaphore, #tpu.memory_space<semaphore_mem>>
    %51 = tpu.memref_squeeze %50 : memref<1x1x!tpu.dma_semaphore, #tpu.memory_space<semaphore_mem>> -> memref<!tpu.dma_semaphore, #tpu.memory_space<semaphore_mem>>
    tpu.enqueue_dma source(%47 : memref<256xf32, #tpu.memory_space<any>>) target(%49 : memref<256xf32, #tpu.memory_space<any>>) target_semaphore(%51 : memref<!tpu.dma_semaphore, #tpu.memory_space<semaphore_mem>>)
    %c0_i32_36 = arith.constant 0 : i32
    %c4_i32 = arith.constant 4 : i32
    %52 = arith.addi %c0_i32_36, %c4_i32 : i32
    %c1_i32_37 = arith.constant 1 : i32
    scf.for %arg7 = %c0_i32_36 to %52 step %c1_i32_37  : i32 {
      %c4_i32_39 = arith.constant 4 : i32
      %c0_i32_40 = arith.constant 0 : i32
      %53 = arith.cmpi eq, %c4_i32_39, %c0_i32_40 : i32
      %c1_i32_41 = arith.constant 1 : i32
      %54 = arith.select %53, %c1_i32_41, %c4_i32_39 : i32
      %55 = arith.remsi %arg7, %54 : i32
      %c0_i32_42 = arith.constant 0 : i32
      %56 = arith.cmpi ne, %55, %c0_i32_42 : i32
      %c0_i32_43 = arith.constant 0 : i32
      %57 = arith.cmpi slt, %55, %c0_i32_43 : i32
      %c0_i32_44 = arith.constant 0 : i32
      %58 = arith.cmpi slt, %54, %c0_i32_44 : i32
      %59 = arith.xori %57, %58 : i1
      %60 = arith.andi %59, %56 : i1
      %61 = arith.addi %55, %54 : i32
      %62 = arith.select %60, %61, %55 : i32
      %c4_i32_45 = arith.constant 4 : i32
      %63 = arith.addi %arg7, %c4_i32_45 : i32
      %c3_i32_46 = arith.constant 3 : i32
      %64 = arith.minsi %63, %c3_i32_46 : i32
      %65 = arith.index_cast %64 : i32 to index
      %66 = memref.load %arg1[%65] : memref<4xi32, #tpu.memory_space<smem>>
      %c0_i32_47 = arith.constant 0 : i32
      %c0_i32_48 = arith.constant 0 : i32
      %c0_i32_49 = arith.constant 0 : i32
      %c0_i32_50 = arith.constant 0 : i32
      %67 = tpu.memref_slice %arg2[%c0_i32_47, %c0_i32_50] : memref<4x256xf32, #tpu.memory_space<any>> -> memref<1x256xf32, #tpu.memory_space<any>>
      %68 = tpu.memref_squeeze %67 : memref<1x256xf32, #tpu.memory_space<any>> -> memref<256xf32, #tpu.memory_space<any>>
      %c0_i32_51 = arith.constant 0 : i32
      %69 = tpu.memref_slice %arg4[%c0_i32_48, %c0_i32_51] : memref<4x256xf32, #tpu.memory_space<any>> -> memref<1x256xf32, #tpu.memory_space<any>>
      %70 = tpu.memref_squeeze %69 : memref<1x256xf32, #tpu.memory_space<any>> -> memref<256xf32, #tpu.memory_space<any>>
      %71 = tpu.memref_slice %arg6[%62, %c0_i32_49] : memref<4x2x!tpu.dma_semaphore, #tpu.memory_space<semaphore_mem>> -> memref<1x1x!tpu.dma_semaphore, #tpu.memory_space<semaphore_mem>>
      %72 = tpu.memref_squeeze %71 : memref<1x1x!tpu.dma_semaphore, #tpu.memory_space<semaphore_mem>> -> memref<!tpu.dma_semaphore, #tpu.memory_space<semaphore_mem>>
      tpu.wait_dma2 semaphore(%72 : memref<!tpu.dma_semaphore, #tpu.memory_space<semaphore_mem>>) src(%68 : memref<256xf32, #tpu.memory_space<any>>) dst(%70 : memref<256xf32, #tpu.memory_space<any>>)
      %c0_i32_52 = arith.constant 0 : i32
      %c0_i32_53 = arith.constant 0 : i32
      %c1_i32_54 = arith.constant 1 : i32
      %c0_i32_55 = arith.constant 0 : i32
      %73 = tpu.memref_slice %arg3[%c0_i32_52, %c0_i32_55] : memref<4x256xf32, #tpu.memory_space<any>> -> memref<1x256xf32, #tpu.memory_space<any>>
      %74 = tpu.memref_squeeze %73 : memref<1x256xf32, #tpu.memory_space<any>> -> memref<256xf32, #tpu.memory_space<any>>
      %c0_i32_56 = arith.constant 0 : i32
      %75 = tpu.memref_slice %arg5[%c0_i32_53, %c0_i32_56] : memref<4x256xf32, #tpu.memory_space<any>> -> memref<1x256xf32, #tpu.memory_space<any>>
      %76 = tpu.memref_squeeze %75 : memref<1x256xf32, #tpu.memory_space<any>> -> memref<256xf32, #tpu.memory_space<any>>
      %77 = tpu.memref_slice %arg6[%62, %c1_i32_54] : memref<4x2x!tpu.dma_semaphore, #tpu.memory_space<semaphore_mem>> -> memref<1x1x!tpu.dma_semaphore, #tpu.memory_space<semaphore_mem>>
      %78 = tpu.memref_squeeze %77 : memref<1x1x!tpu.dma_semaphore, #tpu.memory_space<semaphore_mem>> -> memref<!tpu.dma_semaphore, #tpu.memory_space<semaphore_mem>>
      tpu.wait_dma2 semaphore(%78 : memref<!tpu.dma_semaphore, #tpu.memory_space<semaphore_mem>>) src(%74 : memref<256xf32, #tpu.memory_space<any>>) dst(%76 : memref<256xf32, #tpu.memory_space<any>>)
      %c4_i32_57 = arith.constant 4 : i32
      %79 = arith.cmpi slt, %63, %c4_i32_57 : i32
      %80 = arith.extui %79 : i1 to i32
      %c0_i32_58 = arith.constant 0 : i32
      %81 = arith.cmpi ne, %80, %c0_i32_58 : i32
      scf.if %81 {
        %c0_i32_59 = arith.constant 0 : i32
        %c0_i32_60 = arith.constant 0 : i32
        %82 = tpu.memref_slice %arg2[%66, %c0_i32_60] : memref<4x256xf32, #tpu.memory_space<any>> -> memref<1x256xf32, #tpu.memory_space<any>>
        %83 = tpu.memref_squeeze %82 : memref<1x256xf32, #tpu.memory_space<any>> -> memref<256xf32, #tpu.memory_space<any>>
        %c0_i32_61 = arith.constant 0 : i32
        %84 = tpu.memref_slice %arg4[%63, %c0_i32_61] : memref<4x256xf32, #tpu.memory_space<any>> -> memref<1x256xf32, #tpu.memory_space<any>>
        %85 = tpu.memref_squeeze %84 : memref<1x256xf32, #tpu.memory_space<any>> -> memref<256xf32, #tpu.memory_space<any>>
        %86 = tpu.memref_slice %arg6[%62, %c0_i32_59] : memref<4x2x!tpu.dma_semaphore, #tpu.memory_space<semaphore_mem>> -> memref<1x1x!tpu.dma_semaphore, #tpu.memory_space<semaphore_mem>>
        %87 = tpu.memref_squeeze %86 : memref<1x1x!tpu.dma_semaphore, #tpu.memory_space<semaphore_mem>> -> memref<!tpu.dma_semaphore, #tpu.memory_space<semaphore_mem>>
        tpu.enqueue_dma source(%83 : memref<256xf32, #tpu.memory_space<any>>) target(%85 : memref<256xf32, #tpu.memory_space<any>>) target_semaphore(%87 : memref<!tpu.dma_semaphore, #tpu.memory_space<semaphore_mem>>)
        %c1_i32_62 = arith.constant 1 : i32
        %c0_i32_63 = arith.constant 0 : i32
        %88 = tpu.memref_slice %arg3[%66, %c0_i32_63] : memref<4x256xf32, #tpu.memory_space<any>> -> memref<1x256xf32, #tpu.memory_space<any>>
        %89 = tpu.memref_squeeze %88 : memref<1x256xf32, #tpu.memory_space<any>> -> memref<256xf32, #tpu.memory_space<any>>
        %c0_i32_64 = arith.constant 0 : i32
        %90 = tpu.memref_slice %arg5[%63, %c0_i32_64] : memref<4x256xf32, #tpu.memory_space<any>> -> memref<1x256xf32, #tpu.memory_space<any>>
        %91 = tpu.memref_squeeze %90 : memref<1x256xf32, #tpu.memory_space<any>> -> memref<256xf32, #tpu.memory_space<any>>
        %92 = tpu.memref_slice %arg6[%62, %c1_i32_62] : memref<4x2x!tpu.dma_semaphore, #tpu.memory_space<semaphore_mem>> -> memref<1x1x!tpu.dma_semaphore, #tpu.memory_space<semaphore_mem>>
        %93 = tpu.memref_squeeze %92 : memref<1x1x!tpu.dma_semaphore, #tpu.memory_space<semaphore_mem>> -> memref<!tpu.dma_semaphore, #tpu.memory_space<semaphore_mem>>
        tpu.enqueue_dma source(%89 : memref<256xf32, #tpu.memory_space<any>>) target(%91 : memref<256xf32, #tpu.memory_space<any>>) target_semaphore(%93 : memref<!tpu.dma_semaphore, #tpu.memory_space<semaphore_mem>>)
      } else {
      }
    }
    %c4_i32_38 = arith.constant 4 : i32
    return
  }
}

</mosaic_0001>

<llo_original>
// kernel: tpu_custom_call.1
$region0: #{tpu_custom_call.1}
  #allocation0 [shape = 'u32[]', space=smem, size = 0x4, offset = 0x4, fixed_abs, tag = 'smem constant byte address 0x4 - core index']
  #allocation1 [shape = 'u32[144,128]{1,0:T(1,128)}', space=vmem, size = 0x12000, scoped, tag = 'internal scratch']
  #allocation2 [shape = 's32[8]{0}', space=sflag, size = 0x20, scoped, tag = 'scratch operand']
  #allocation3 [shape = 's32[1]{0}', space=sflag, size = 0x4, scoped, tag = 'scoped memory for tpu_custom_call.1']
  #allocation4 [shape = 'u8[512]{0}', space=smem, size = 0x200, scoped, tag = 'prefetched SMEM operand 0']
  #allocation5 [shape = 's32[]', space=sflag, size = 0x4, offset = 0, fixed_abs, tag = 'sflag constant byte address 0x0 - dummy sync flag']
  #allocation7 [shape = 's32[]', space=sflag, size = 0x4, offset = 0, fixed_abs, tag = 'sflag constant byte address 0x0 - dummy sync flag']
  #allocation9 [shape = 's32[]', space=sflag, size = 0x4, offset = 0, fixed_abs, tag = 'sflag constant byte address 0x0 - dummy sync flag']
  #allocation11 [shape = 's32[]', space=sflag, size = 0x4, offset = 0, fixed_abs, tag = 'sflag constant byte address 0x0 - dummy sync flag']
  #allocation13 [shape = 's32[]', space=sflag, size = 0x4, offset = 0, fixed_abs, tag = 'sflag constant byte address 0x0 - dummy sync flag']
  #allocation15 [shape = 's32[]', space=sflag, size = 0x4, offset = 0, fixed_abs, tag = 'sflag constant byte address 0x0 - dummy sync flag']
  #allocation17 [shape = 's32[]', space=sflag, size = 0x4, offset = 0, fixed_abs, tag = 'sflag constant byte address 0x0 - dummy sync flag']
  #allocation19 [shape = 's32[]', space=sflag, size = 0x4, offset = 0, fixed_abs, tag = 'sflag constant byte address 0x0 - dummy sync flag']
  #allocation21 [shape = 's32[]', space=sflag, size = 0x4, offset = 0, fixed_abs, tag = 'sflag constant byte address 0x0 - dummy sync flag']
  #allocation23 [shape = 's32[]', space=sflag, size = 0x4, offset = 0, fixed_abs, tag = 'sflag constant byte address 0x0 - dummy sync flag']
  %s0 = inlined_call_operand.hbm [shape: s32[4], index: 0, kind: input, shape index: {}]
  %s1 = inlined_call_operand.hbm [shape: f32[4,256], index: 1, kind: input, shape index: {}]
  %s2 = inlined_call_operand.hbm [shape: f32[4,256], index: 2, kind: input, shape index: {}]
  %s3 = inlined_call_operand.hbm [shape: f32[4,256], index: 3, kind: output, shape index: {0}]
  %s4 = inlined_call_operand.hbm [shape: f32[4,256], index: 4, kind: output, shape index: {1}]
  %5 = xla_tuple %s3, %s4
  %s6 = sld [smem:[#allocation0]]
  $region13: #{tpu_custom_call.1} parent=0
    _
  %s8 = ssub.s32 1, %s6
  %s9 = scalar_select 0, %s8, %s6
  %11 = dma.hbm_to_smem %s0, 16, [#allocation4], [#allocation3]
  %12 = dma.done [#allocation3], 16
  %13 = sfence
  $region1: #{tpu_custom_call.1} parent=0
    #allocation6 [shape = 'u32[3]{0}', space=smem, size = 0xc, scoped, tag = 'DMA stride descriptor']
    #allocation8 [shape = 'u32[3]{0}', space=smem, size = 0xc, scoped, tag = 'DMA stride descriptor']
    #allocation10 [shape = 'u32[3]{0}', space=smem, size = 0xc, scoped, tag = 'DMA stride descriptor']
    #allocation12 [shape = 'u32[3]{0}', space=smem, size = 0xc, scoped, tag = 'DMA stride descriptor']
    #allocation14 [shape = 'u32[3]{0}', space=smem, size = 0xc, scoped, tag = 'DMA stride descriptor']
    #allocation16 [shape = 'u32[3]{0}', space=smem, size = 0xc, scoped, tag = 'DMA stride descriptor']
    #allocation18 [shape = 'u32[3]{0}', space=smem, size = 0xc, scoped, tag = 'DMA stride descriptor']
    #allocation20 [shape = 'u32[3]{0}', space=smem, size = 0xc, scoped, tag = 'DMA stride descriptor']
    %s14 = sld [smem:[#allocation4]]
    %s15 = sshrl.u32 %s14, 2
    %s16 = sand.u32 %s14, 3
    %s17 = smul.u32 %s15, 8
    %s18 = sadd.s32 %s16, %s17
    %s19 = smul.addr %s18, 16
    %s20 = scalar_lea.hbm %s1, %s19
    %s22 = sshll.u32 1, 14
    %s23 = sxor.u32 4294967295, %s22
    %s26 = sshll.u32 3, 24
    %s27 = sxor.u32 4294967295, %s26
    %s28 = sand.u32 0, %s27
    %s30 = sor.u32 %s28, 0
    %33 = sst [smem:[#allocation6]] 64
    %s34 = scalar_lea.smem [#allocation6], 1
    %35 = sst [smem:[%s34]] 64
    %s36 = scalar_lea.smem [#allocation6], 2
    %37 = sst [smem:[%s36]] 1
    %39 = dma.general %s20, 32, %s3, [#allocation2], [#allocation5], [#allocation6], %s30, 0
    %s40 = smul.addr %s18, 16
    %s41 = scalar_lea.hbm %s2, %s40
    %s42 = scalar_lea.sflag [#allocation2], 1
    %s44 = sshll.u32 1, 14
    %s45 = sxor.u32 4294967295, %s44
    %s48 = sshll.u32 3, 24
    %s49 = sxor.u32 4294967295, %s48
    %s50 = sand.u32 0, %s49
    %s52 = sor.u32 %s50, 0
    %55 = sst [smem:[#allocation8]] 64
    %s56 = scalar_lea.smem [#allocation8], 1
    %57 = sst [smem:[%s56]] 64
    %s58 = scalar_lea.smem [#allocation8], 2
    %59 = sst [smem:[%s58]] 1
    %61 = dma.general %s41, 32, %s4, %s42, [#allocation7], [#allocation8], %s52, 0
    %s62 = sld [smem:[#allocation4 + $0x1]]
    %s63 = sshrl.u32 %s62, 2
    %s64 = sand.u32 %s62, 3
    %s65 = smul.u32 %s63, 8
    %s66 = sadd.s32 %s64, %s65
    %s67 = smul.addr %s66, 16
    %s68 = scalar_lea.hbm %s1, %s67
    %s69 = scalar_lea.hbm %s3, 16
    %s70 = scalar_lea.sflag [#allocation2], 2
    %s72 = sshll.u32 1, 14
    %s73 = sxor.u32 4294967295, %s72
    %s76 = sshll.u32 3, 24
    %s77 = sxor.u32 4294967295, %s76
    %s78 = sand.u32 0, %s77
    %s80 = sor.u32 %s78, 0
    %83 = sst [smem:[#allocation10]] 64
    %s84 = scalar_lea.smem [#allocation10], 1
    %85 = sst [smem:[%s84]] 64
    %s86 = scalar_lea.smem [#allocation10], 2
    %87 = sst [smem:[%s86]] 1
    %89 = dma.general %s68, 32, %s69, %s70, [#allocation9], [#allocation10], %s80, 0
    %s90 = smul.addr %s66, 16
    %s91 = scalar_lea.hbm %s2, %s90
    %s92 = scalar_lea.hbm %s4, 16
    %s93 = scalar_lea.sflag [#allocation2], 3
    %s95 = sshll.u32 1, 14
    %s96 = sxor.u32 4294967295, %s95
    %s99 = sshll.u32 3, 24
    %s100 = sxor.u32 4294967295, %s99
    %s101 = sand.u32 0, %s100
    %s103 = sor.u32 %s101, 0
    %106 = sst [smem:[#allocation12]] 64
    %s107 = scalar_lea.smem [#allocation12], 1
    %108 = sst [smem:[%s107]] 64
    %s109 = scalar_lea.smem [#allocation12], 2
    %110 = sst [smem:[%s109]] 1
    %112 = dma.general %s91, 32, %s92, %s93, [#allocation11], [#allocation12], %s103, 0
    %s113 = sld [smem:[#allocation4 + $0x2]]
    %s114 = sshrl.u32 %s113, 2
    %s115 = sand.u32 %s113, 3
    %s116 = smul.u32 %s114, 8
    %s117 = sadd.s32 %s115, %s116
    %s118 = smul.addr %s117, 16
    %s119 = scalar_lea.hbm %s1, %s118
    %s120 = scalar_lea.hbm %s3, 32
    %s121 = scalar_lea.sflag [#allocation2], 4
    %s123 = sshll.u32 1, 14
    %s124 = sxor.u32 4294967295, %s123
    %s127 = sshll.u32 3, 24
    %s128 = sxor.u32 4294967295, %s127
    %s129 = sand.u32 0, %s128
    %s131 = sor.u32 %s129, 0
    %134 = sst [smem:[#allocation14]] 64
    %s135 = scalar_lea.smem [#allocation14], 1
    %136 = sst [smem:[%s135]] 64
    %s137 = scalar_lea.smem [#allocation14], 2
    %138 = sst [smem:[%s137]] 1
    %140 = dma.general %s119, 32, %s120, %s121, [#allocation13], [#allocation14], %s131, 0
    %s141 = smul.addr %s117, 16
    %s142 = scalar_lea.hbm %s2, %s141
    %s143 = scalar_lea.hbm %s4, 32
    %s144 = scalar_lea.sflag [#allocation2], 5
    %s146 = sshll.u32 1, 14
    %s147 = sxor.u32 4294967295, %s146
    %s150 = sshll.u32 3, 24
    %s151 = sxor.u32 4294967295, %s150
    %s152 = sand.u32 0, %s151
    %s154 = sor.u32 %s152, 0
    %157 = sst [smem:[#allocation16]] 64
    %s158 = scalar_lea.smem [#allocation16], 1
    %159 = sst [smem:[%s158]] 64
    %s160 = scalar_lea.smem [#allocation16], 2
    %161 = sst [smem:[%s160]] 1
    %163 = dma.general %s142, 32, %s143, %s144, [#allocation15], [#allocation16], %s154, 0
    %s164 = sld [smem:[#allocation4 + $0x3]]
    %s165 = sshrl.u32 %s164, 2
    %s166 = sand.u32 %s164, 3
    %s167 = smul.u32 %s165, 8
    %s168 = sadd.s32 %s166, %s167
    %s169 = smul.addr %s168, 16
    %s170 = scalar_lea.hbm %s1, %s169
    %s171 = scalar_lea.hbm %s3, 48
    %s172 = scalar_lea.sflag [#allocation2], 6
    %s174 = sshll.u32 1, 14
    %s175 = sxor.u32 4294967295, %s174
    %s178 = sshll.u32 3, 24
    %s179 = sxor.u32 4294967295, %s178
    %s180 = sand.u32 0, %s179
    %s182 = sor.u32 %s180, 0
    %185 = sst [smem:[#allocation18]] 64
    %s186 = scalar_lea.smem [#allocation18], 1
    %187 = sst [smem:[%s186]] 64
    %s188 = scalar_lea.smem [#allocation18], 2
    %189 = sst [smem:[%s188]] 1
    %191 = dma.general %s170, 32, %s171, %s172, [#allocation17], [#allocation18], %s182, 0
    %s192 = smul.addr %s168, 16
    %s193 = scalar_lea.hbm %s2, %s192
    %s194 = scalar_lea.hbm %s4, 48
    %s195 = scalar_lea.sflag [#allocation2], 7
    %s197 = sshll.u32 1, 14
    %s198 = sxor.u32 4294967295, %s197
    %s201 = sshll.u32 3, 24
    %s202 = sxor.u32 4294967295, %s201
    %s203 = sand.u32 0, %s202
    %s205 = sor.u32 %s203, 0
    %208 = sst [smem:[#allocation20]] 64
    %s209 = scalar_lea.smem [#allocation20], 1
    %210 = sst [smem:[%s209]] 64
    %s211 = scalar_lea.smem [#allocation20], 2
    %212 = sst [smem:[%s211]] 1
    %214 = dma.general %s193, 32, %s194, %s195, [#allocation19], [#allocation20], %s205, 0
    loop: start=0, step=1, limit=4
    $region2: #{tpu_custom_call.1} parent=1 // loop_pre_header
      _
    $region3: #{tpu_custom_call.1} parent=1 // loop_header
      %s216 = sphi 0, %s220
      %p217 = scmp.ge.s32.totalorder %s216, 4
    $region4: #{tpu_custom_call.1} parent=1 // loop_header_branch
      %219 = sbr.rel (%p217) target = $region8
    $region5: #{tpu_custom_call.1} parent=1 // loop_body
      %p221 = scmp.lt.s32.totalorder %s216, 0
      %s222 = ssub.s32 0, %s216
      %s223 = scalar_select %p221, %s222, %s216
      %s224 = sand.u32 %s223, 3
      %s225 = ssub.s32 0, %s224
      %s226 = scalar_select %p221, %s225, %s224
      %p227 = scmp.ne.s32.totalorder %s226, 0
      %p228 = scmp.lt.s32.totalorder %s226, 0
      %p229 = pnand %p228, %p227
      %p230 = pneg %p229
      %s231 = sadd.s32 %s226, 4
      %s232 = scalar_select %p230, %s231, %s226
      %s233 = sadd.s32 %s216, 4
      %p234 = scmp.lt.s32.totalorder %s233, 3
      %s235 = scalar_select %p234, %s233, 3
      %s236 = sld [smem:[#allocation4 + %s235]]
      %s237 = smul.u32 %s232, 2
      %s238 = scalar_lea.sflag [#allocation2], %s237
      %240 = dma.done %s238, 32
      %s241 = sadd.s32 1, %s237
      %s242 = scalar_lea.sflag [#allocation2], %s241
      %244 = dma.done %s242, 32
      %p245 = scmp.lt.s32.totalorder %s233, 4
      // Predicated region
      $region9: #{tpu_custom_call.1} parent=5 // pred_check
        %p246 = pneg %p245
      $region10: #{tpu_custom_call.1} parent=5 // pred_check_branch
        %248 = sbr.rel (%p246) target = $region12
      $region11: #{tpu_custom_call.1} parent=5 // pred_region
        #allocation22 [shape = 'u32[3]{0}', space=smem, size = 0xc, scoped, tag = 'DMA stride descriptor']
        #allocation24 [shape = 'u32[3]{0}', space=smem, size = 0xc, scoped, tag = 'DMA stride descriptor']
        %s249 = sshrl.u32 %s236, 2
        %s250 = sand.u32 %s236, 3
        %s251 = smul.u32 %s249, 8
        %s252 = sadd.s32 %s250, %s251
        %s253 = smul.addr %s252, 16
        %s254 = scalar_lea.hbm %s1, %s253
        %s255 = sshrl.u32 %s233, 2
        %s256 = sand.u32 %s233, 3
        %s257 = smul.u32 %s255, 8
        %s258 = sadd.s32 %s256, %s257
        %s259 = smul.addr %s258, 16
        %s260 = scalar_lea.hbm %s3, %s259
        %s262 = sshll.u32 1, 14
        %s263 = sxor.u32 4294967295, %s262
        %s266 = sshll.u32 3, 24
        %s267 = sxor.u32 4294967295, %s266
        %s268 = sand.u32 0, %s267
        %s270 = sor.u32 %s268, 0
        %273 = sst [smem:[#allocation22]] 64
        %s274 = scalar_lea.smem [#allocation22], 1
        %275 = sst [smem:[%s274]] 64
        %s276 = scalar_lea.smem [#allocation22], 2
        %277 = sst [smem:[%s276]] 1
        %279 = dma.general %s254, 32, %s260, %s238, [#allocation21], [#allocation22], %s270, 0
        %s280 = smul.addr %s252, 16
        %s281 = scalar_lea.hbm %s2, %s280
        %s282 = smul.addr %s258, 16
        %s283 = scalar_lea.hbm %s4, %s282
        %s285 = sshll.u32 1, 14
        %s286 = sxor.u32 4294967295, %s285
        %s289 = sshll.u32 3, 24
        %s290 = sxor.u32 4294967295, %s289
        %s291 = sand.u32 0, %s290
        %s293 = sor.u32 %s291, 0
        %296 = sst [smem:[#allocation24]] 64
        %s297 = scalar_lea.smem [#allocation24], 1
        %298 = sst [smem:[%s297]] 64
        %s299 = scalar_lea.smem [#allocation24], 2
        %300 = sst [smem:[%s299]] 1
        %302 = dma.general %s281, 32, %s283, %s242, [#allocation23], [#allocation24], %s293, 0
      $region12: #{tpu_custom_call.1} parent=5 // pred_fallthru
        _
    $region6: #{tpu_custom_call.1} parent=1 // loop_footer
      %s220 = sadd.s32 1, %s216
    $region7: #{tpu_custom_call.1} parent=1 // loop_footer_branch
      %215 = sbr.rel target = $region3
    $region8: #{tpu_custom_call.1} parent=1 // loop_exit
      _
  %303 = vsyncmov [#allocation2]
  %s304 = vpop.sfrf %303
  %p305 = scmp.eq.s32.totalorder %s304, 0
  %p306 = pneg %p305
  %308 = shalt.err (%p306)
  %s309 = scalar_lea.sflag [#allocation2], 1
  %310 = vsyncmov %s309
  %s311 = vpop.sfrf %310
  %p312 = scmp.eq.s32.totalorder %s311, 0
  %p313 = pneg %p312
  %315 = shalt.err (%p313)
  %s316 = scalar_lea.sflag [#allocation2], 2
  %317 = vsyncmov %s316
  %s318 = vpop.sfrf %317
  %p319 = scmp.eq.s32.totalorder %s318, 0
  %p320 = pneg %p319
  %322 = shalt.err (%p320)
  %s323 = scalar_lea.sflag [#allocation2], 3
  %324 = vsyncmov %s323
  %s325 = vpop.sfrf %324
  %p326 = scmp.eq.s32.totalorder %s325, 0
  %p327 = pneg %p326
  %329 = shalt.err (%p327)
  %s330 = scalar_lea.sflag [#allocation2], 4
  %331 = vsyncmov %s330
  %s332 = vpop.sfrf %331
  %p333 = scmp.eq.s32.totalorder %s332, 0
  %p334 = pneg %p333
  %336 = shalt.err (%p334)
  %s337 = scalar_lea.sflag [#allocation2], 5
  %338 = vsyncmov %s337
  %s339 = vpop.sfrf %338
  %p340 = scmp.eq.s32.totalorder %s339, 0
  %p341 = pneg %p340
  %343 = shalt.err (%p341)
  %s344 = scalar_lea.sflag [#allocation2], 6
  %345 = vsyncmov %s344
  %s346 = vpop.sfrf %345
  %p347 = scmp.eq.s32.totalorder %s346, 0
  %p348 = pneg %p347
  %350 = shalt.err (%p348)
  %s351 = scalar_lea.sflag [#allocation2], 7
  %352 = vsyncmov %s351
  %s353 = vpop.sfrf %352
  %p354 = scmp.eq.s32.totalorder %s353, 0
  %p355 = pneg %p354
  %357 = shalt.err (%p355)

</llo_original>
